<compile_context>
chip_gen: v5e
topology: v5e:2x2
jax: 0.10.0
libtpu: 0.0.40
codegen_flags: <defaults>
</compile_context>

<pallas_src>
from functools import partial

import jax
import jax.numpy as jnp
from jax.experimental import pallas as pl
from jax.experimental.pallas import tpu as pltpu


def _round_up(x, m):
    return ((x + m - 1) // m) * m


# -----------------------------------------------------------------------------------
# Fused focal-loss / class-error kernel over one (TP, C) row tile.
#   g_ref   : (TP, C)   bf16  g-view logits tile (padded rows hold -1e9)
#   lbl_ref : (TP, 1)   int32 target class per row, -1 == "no object" / padding
#   out_ref : (1, 8, 128) f32 per-core accumulator slab:
#               [0,0,0] += sum of focal loss over the tile
#               [0,0,1] += count of matched rows whose top-1 class == target
# Grid = (num_cores [parallel], tiles_per_core [arbitrary]).
# -----------------------------------------------------------------------------------
def _v2v_focal_kernel(g_ref, lbl_ref, out_ref, *, focal_alpha):
    t_idx = pl.program_id(1)

    g = g_ref[...].astype(jnp.float32)          # (TP, C) -- all math stays f32
    lbl = lbl_ref[...]                          # (TP, 1) int32
    TP, C = g.shape

    cls_iota = jax.lax.broadcasted_iota(jnp.int32, (TP, C), 1)
    t = (cls_iota == lbl).astype(jnp.float32)   # one-hot target; all-zero row if lbl == -1

    # Sigmoid focal loss (alpha=focal_alpha, gamma=2) via stable BCE-with-logits.
    # Two heavy EUP transcendentals per element (exp, log); sigmoid is rebuilt from the
    # same exp via an approximate reciprocal + sign select.
    e = jnp.exp(-jnp.abs(g))
    ce = jnp.maximum(g, 0.0) - g * t + jnp.log(1.0 + e)
    r = pl.reciprocal(1.0 + e, approx=True)
    p = jnp.where(g >= 0.0, r, e * r)           # sigmoid(g)
    p_t = p * t + (1.0 - p) * (1.0 - t)
    alpha_t = focal_alpha * t + (1.0 - focal_alpha) * (1.0 - t)
    loss = alpha_t * ce * (1.0 - p_t) ** 2
    tile_loss = jnp.sum(loss)                   # raw sum; /num_boxes happens outside

    # Top-1 class-match count over matched rows; no (TP, C) one-hot is materialized.
    # TODO(synk): jnp.argmax(axis=-1) would be a single variadic XLU reduce; the
    #             max + masked-iota + min construct is kept for guaranteed lowering.
    mx = jnp.max(g, axis=-1, keepdims=True)
    g_arg = jnp.min(jnp.where(g == mx, cls_iota, jnp.int32(C)), axis=-1, keepdims=True)
    matched = (g_arg == lbl) & (lbl >= 0)       # (TP, 1); padding rows have lbl == -1
    tile_correct = jnp.sum(jnp.where(matched, 1.0, 0.0))

    @pl.when(t_idx == 0)
    def _():
        out_ref[...] = jnp.zeros_like(out_ref)

    sub = jax.lax.broadcasted_iota(jnp.int32, (1, 8, 128), 1)
    lane = jax.lax.broadcasted_iota(jnp.int32, (1, 8, 128), 2)
    out_ref[...] += jnp.where(
        (sub == 0) & (lane == 0), jnp.reshape(tile_loss, (1, 1, 1)),
        jnp.where((sub == 0) & (lane == 1), jnp.reshape(tile_correct, (1, 1, 1)), 0.0))


def v2v_fused_losses(g_logits_2d, target_label_col, *, num_boxes, num_matched,
                     focal_alpha=0.25, row_tile=512):
    """Returns (loss_map_ce, map_class_error) scalars for flat (P, C) g-view logits."""
    P, C = g_logits_2d.shape

    # v7x has 2 TensorCores/chip: shard the row tiles across them with a leading
    # "parallel" grid axis; v5e/v6e (1 TC) degenerate to nc = 1.
    try:
        nc = 2 if "v7" in jax.devices()[0].device_kind.lower() else 1
    except Exception:  # defensive: fall back to a single-core layout
        nc = 1

    tp = max(16, min(_round_up(int(row_tile), 16), _round_up(P, 16)))  # bf16 sublane mult
    tiles = pl.cdiv(P, tp)
    tiles_per_core = pl.cdiv(tiles, nc)
    p_pad = nc * tiles_per_core * tp

    # bf16 inputs halve DMA bytes; padded rows (huge-negative logits, label -1)
    # contribute exactly zero loss and zero correct-count.
    g_bf16 = g_logits_2d.astype(jnp.bfloat16)
    lbl = target_label_col.astype(jnp.int32)
    if p_pad != P:
        g_bf16 = jnp.pad(g_bf16, ((0, p_pad - P), (0, 0)), constant_values=-1e9)
        lbl = jnp.pad(lbl, ((0, p_pad - P), (0, 0)), constant_values=-1)

    kern = partial(_v2v_focal_kernel, focal_alpha=float(focal_alpha))
    cost = pl.CostEstimate(
        flops=20 * p_pad * C,
        transcendentals=2 * p_pad * C,
        bytes_accessed=p_pad * C * 2 + p_pad * 4 + nc * 8 * 128 * 4)

    partials = pl.pallas_call(
        kern,
        grid=(nc, tiles_per_core),
        in_specs=[
            pl.BlockSpec((tp, C), lambda c, t: (c * tiles_per_core + t, 0)),
            pl.BlockSpec((tp, 1), lambda c, t: (c * tiles_per_core + t, 0)),
        ],
        out_specs=pl.BlockSpec((1, 8, 128), lambda c, t: (c, 0, 0)),
        out_shape=jax.ShapeDtypeStruct((nc, 8, 128), jnp.float32),
        compiler_params=pltpu.CompilerParams(
            dimension_semantics=("parallel", "arbitrary")),
        cost_estimate=cost,
    )(g_bf16, lbl)

    loss_sum = jnp.sum(partials[:, 0, 0])
    correct = jnp.sum(partials[:, 0, 1])
    # torch: sigmoid_focal_loss(...).mean(1).sum()/num_boxes * num_queries == sum/num_boxes
    loss_ce = loss_sum / jnp.float32(max(float(num_boxes), 1.0))
    # torch: 100 - accuracy(matched logits, matched labels); defined as 100 if no matches.
    class_err = 100.0 - correct * (100.0 / float(max(int(num_matched), 1)))
    return loss_ce, class_err


# ----------------------------------------------------------------------------------
# The criterion (mirrors V2VCriterion; no learnable parameters).
# ----------------------------------------------------------------------------------
class V2VCriterion:
    def __init__(self, losses, num_classes, weight_dict, args=None):
        self.losses = losses
        self.num_classes = num_classes
        self.weight_dict = weight_dict
        self.focal_alpha = 0.25

    def convert_pred_logits_to_target(self, top_k_outputs):
        # Vectorized: keep the a-view logits batched; pseudo-labels (argmax) are taken
        # right before the kernel.  (the reference's softmax "scores" are dead code.)
        pred_logits = top_k_outputs["pred_logits"]            # (B, Q, C)
        boxes = top_k_outputs["pred_boxes"]                   # (B, Q, 4)
        assert pred_logits.shape[0] == boxes.shape[0]
        B, Q, _ = pred_logits.shape
        return {"labels_logits": pred_logits, "boxes": boxes, "sizes": (Q,) * B}

    def _get_src_permutation_idx(self, indices):
        # Faithful to the reference ("Modified from DETR"): batch ids come from the FIRST
        # element of each pair, src ids from the SECOND element.
        batch_idx = jnp.concatenate(
            [jnp.full(src.shape, i, dtype=jnp.int32) for i, (src, _) in enumerate(indices)])
        src_idx = jnp.concatenate([tgt for (_, tgt) in indices]).astype(jnp.int32)
        return batch_idx, src_idx

    def loss_labels(self, outputs, targets, assignments, num_boxes, log=True):
        src_logits = outputs["pred_logits"]                   # (B, Q, C) g-view
        a_logits = targets["labels_logits"]                   # (B, Q, C) a-view
        B, Q, C = src_logits.shape
        P = B * Q

        # a-view pseudo-labels + Hungarian gather/scatter: trivial fused XLA ops on
        # (P,)-sized int vectors (no O(P^2) work, nothing heavy materialized).
        a_labels = jnp.argmax(a_logits, axis=-1).astype(jnp.int32).reshape(P)

        batch_idx, src_idx = self._get_src_permutation_idx(assignments)
        tgt_idx = jnp.concatenate([J for (_, J) in assignments]).astype(jnp.int32)
        flat_src = batch_idx * Q + src_idx                    # g positions receiving a target
        flat_tgt = batch_idx * Q + tgt_idx                    # a positions providing the label
        # target_classes scatter (-1 == "no object").  Duplicate src positions are
        # last-write-wins, same as torch advanced-index assignment up to ordering
        # (cannot occur for Hungarian assignments).
        target_label = jnp.full((P,), -1, dtype=jnp.int32).at[flat_src].set(a_labels[flat_tgt])

        n_matched = int(flat_src.shape[0])                    # static
        loss_ce, class_err = v2v_fused_losses(
            src_logits.reshape(P, C), target_label.reshape(P, 1),
            num_boxes=num_boxes, num_matched=n_matched, focal_alpha=self.focal_alpha)

        losses = {"loss_map_ce": loss_ce}
        if log:
            losses["map_class_error"] = class_err
        return losses

    def get_loss(self, loss, outputs, targets, assignments, num_boxes):
        loss_map = {"labels_map": self.loss_labels}
        assert loss in loss_map, f"do you really want to compute {loss} loss?"
        return loss_map[loss](outputs, targets, assignments, num_boxes)

    def __call__(self, g_outputs, a_outputs, assignments, g_top_k_outputs, a_top_k_outputs):
        a_targets = self.convert_pred_logits_to_target(a_top_k_outputs)
        # world_size == 1, no all_reduce; sizes are static so this is a Python float.
        num_boxes = max(float(sum(a_targets["sizes"])), 1.0)
        losses = {}
        for loss in self.losses:
            losses.update(self.get_loss(loss, g_top_k_outputs, a_targets,
                                        assignments, num_boxes))
        return losses


if __name__ == "__main__":
    key = jax.random.PRNGKey(0)
    B, Q, C = 2, 8, 32  # batch, top-k queries, num_classes

    k1, k2, k3, k4 = jax.random.split(key, 4)
    g_top_k_outputs = {
        "pred_logits": jax.random.normal(k1, (B, Q, C), jnp.float32),
        "pred_boxes": jax.random.uniform(k2, (B, Q, 4), jnp.float32),
    }
    a_top_k_outputs = {
        "pred_logits": jax.random.normal(k3, (B, Q, C), jnp.float32),
        "pred_boxes": jax.random.uniform(k4, (B, Q, 4), jnp.float32),
    }
    # Hungarian-style assignments: per batch a (src_idx, tgt_idx) pair covering all queries.
    assignments = []
    for b in range(B):
        perm = jax.random.permutation(jax.random.fold_in(key, b), Q).astype(jnp.int32)
        assignments.append((jnp.arange(Q, dtype=jnp.int32), perm))

    criterion = V2VCriterion(losses=["labels_map"], num_classes=C,
                             weight_dict={"loss_map_ce": 1.0})
    # g_outputs / a_outputs are only used for device discovery in the torch code.
    out = criterion({}, {"dummy": g_top_k_outputs["pred_logits"]},
                    assignments, g_top_k_outputs, a_top_k_outputs)
    out = jax.block_until_ready(out)
    print("KERNEL_OK")
</pallas_src>

<mosaic_0001>
module attributes {stable_mosaic.version = 11 : i64} {
  func.func @_v2v_focal_kernel(%arg0: i32, %arg1: i32, %arg2: memref<16x32xbf16, #tpu.memory_space<vmem>>, %arg3: memref<16x1xi32, #tpu.memory_space<vmem>>, %arg4: memref<1x8x128xf32, #tpu.memory_space<vmem>>) attributes {dimension_semantics = [#tpu.dimension_semantics<parallel>, #tpu.dimension_semantics<arbitrary>], iteration_bounds = array<i64: 1, 1>, scalar_prefetch = 0 : i64, scratch_operands = 0 : i64, tpu.core_type = #tpu.core_type<tc>, window_params = [{transform_indices = @transform_0, window_bounds = array<i64: 16, 32>}, {transform_indices = @transform_1, window_bounds = array<i64: 16, 1>}, {transform_indices = @transform_2, window_bounds = array<i64: 1, 8, 128>}]} {
    %c0 = arith.constant 0 : index
    %c0_0 = arith.constant 0 : index
    %0 = vector.load %arg2[%c0, %c0_0] : memref<16x32xbf16, #tpu.memory_space<vmem>>, vector<16x32xbf16>
    %1 = arith.extf %0 : vector<16x32xbf16> to vector<16x32xf32>
    %c0_1 = arith.constant 0 : index
    %c0_2 = arith.constant 0 : index
    %2 = vector.load %arg3[%c0_1, %c0_2] : memref<16x1xi32, #tpu.memory_space<vmem>>, vector<16x1xi32>
    %3 = tpu.iota {dimensions = array<i32: 1>} : vector<16x32xi32>
    %4 = vector.broadcast %2 : vector<16x1xi32> to vector<16x32xi32>
    %5 = arith.cmpi eq, %3, %4 : vector<16x32xi32>
    %6 = arith.extui %5 : vector<16x32xi1> to vector<16x32xi32>
    %7 = arith.sitofp %6 : vector<16x32xi32> to vector<16x32xf32>
    %8 = math.absf %1 : vector<16x32xf32>
    %cst = arith.constant 0.000000e+00 : f32
    %9 = vector.broadcast %cst : f32 to vector<16x32xf32>
    %10 = arith.subf %9, %8 : vector<16x32xf32>
    %11 = math.exp %10 : vector<16x32xf32>
    %cst_3 = arith.constant 0.000000e+00 : f32
    %12 = vector.broadcast %cst_3 : f32 to vector<16x32xf32>
    %13 = arith.maximumf %1, %12 : vector<16x32xf32>
    %14 = arith.mulf %1, %7 : vector<16x32xf32>
    %15 = arith.subf %13, %14 : vector<16x32xf32>
    %cst_4 = arith.constant 1.000000e+00 : f32
    %16 = vector.broadcast %cst_4 : f32 to vector<16x32xf32>
    %17 = arith.addf %16, %11 : vector<16x32xf32>
    %18 = math.log %17 : vector<16x32xf32>
    %19 = arith.addf %15, %18 : vector<16x32xf32>
    %cst_5 = arith.constant 1.000000e+00 : f32
    %20 = vector.broadcast %cst_5 : f32 to vector<16x32xf32>
    %21 = arith.addf %20, %11 : vector<16x32xf32>
    %22 = tpu.reciprocal %21 {approx = true} : vector<16x32xf32> -> vector<16x32xf32>
    %cst_6 = arith.constant 0.000000e+00 : f32
    %23 = vector.broadcast %cst_6 : f32 to vector<16x32xf32>
    %24 = arith.cmpf oge, %1, %23 : vector<16x32xf32>
    %25 = arith.mulf %11, %22 : vector<16x32xf32>
    %26 = arith.select %24, %22, %25 : vector<16x32xi1>, vector<16x32xf32>
    %27 = arith.mulf %26, %7 : vector<16x32xf32>
    %cst_7 = arith.constant 1.000000e+00 : f32
    %28 = vector.broadcast %cst_7 : f32 to vector<16x32xf32>
    %29 = arith.subf %28, %26 : vector<16x32xf32>
    %cst_8 = arith.constant 1.000000e+00 : f32
    %30 = vector.broadcast %cst_8 : f32 to vector<16x32xf32>
    %31 = arith.subf %30, %7 : vector<16x32xf32>
    %32 = arith.mulf %29, %31 : vector<16x32xf32>
    %33 = arith.addf %27, %32 : vector<16x32xf32>
    %cst_9 = arith.constant 2.500000e-01 : f32
    %34 = vector.broadcast %cst_9 : f32 to vector<16x32xf32>
    %35 = arith.mulf %34, %7 : vector<16x32xf32>
    %cst_10 = arith.constant 1.000000e+00 : f32
    %36 = vector.broadcast %cst_10 : f32 to vector<16x32xf32>
    %37 = arith.subf %36, %7 : vector<16x32xf32>
    %cst_11 = arith.constant 7.500000e-01 : f32
    %38 = vector.broadcast %cst_11 : f32 to vector<16x32xf32>
    %39 = arith.mulf %38, %37 : vector<16x32xf32>
    %40 = arith.addf %35, %39 : vector<16x32xf32>
    %41 = arith.mulf %40, %19 : vector<16x32xf32>
    %cst_12 = arith.constant 1.000000e+00 : f32
    %42 = vector.broadcast %cst_12 : f32 to vector<16x32xf32>
    %43 = arith.subf %42, %33 : vector<16x32xf32>
    %44 = arith.mulf %43, %43 : vector<16x32xf32>
    %45 = arith.mulf %41, %44 : vector<16x32xf32>
    %46 = vector.shape_cast %45 : vector<16x32xf32> to vector<1x16x32xf32>
    %cst_13 = arith.constant dense<0.000000e+00> : vector<1xf32>
    %47 = vector.multi_reduction <add>, %46, %cst_13 [1, 2] : vector<1x16x32xf32> to vector<1xf32>
    %48 = vector.shape_cast %47 : vector<1xf32> to vector<1x1x1xf32>
    %49 = vector.extract %48[0, 0, 0] : f32 from vector<1x1x1xf32>
    %cst_14 = arith.constant dense<0xFF800000> : vector<16xf32>
    %50 = vector.multi_reduction <maximumf>, %1, %cst_14 [1] : vector<16x32xf32> to vector<16xf32>
    %51 = vector.shape_cast %50 : vector<16xf32> to vector<16x1xf32>
    %52 = vector.broadcast %51 : vector<16x1xf32> to vector<16x32xf32>
    %53 = arith.cmpf oeq, %1, %52 : vector<16x32xf32>
    %c32_i32 = arith.constant 32 : i32
    %54 = vector.broadcast %c32_i32 : i32 to vector<16x32xi32>
    %55 = arith.select %53, %3, %54 : vector<16x32xi1>, vector<16x32xi32>
    %cst_15 = arith.constant dense<2147483647> : vector<16xi32>
    %56 = vector.multi_reduction <minsi>, %55, %cst_15 [1] : vector<16x32xi32> to vector<16xi32>
    %57 = vector.shape_cast %56 : vector<16xi32> to vector<16x1xi32>
    %58 = arith.cmpi eq, %57, %2 : vector<16x1xi32>
    %c0_i32 = arith.constant 0 : i32
    %59 = vector.broadcast %c0_i32 : i32 to vector<16x1xi32>
    %60 = arith.cmpi sge, %2, %59 : vector<16x1xi32>
    %61 = arith.andi %58, %60 : vector<16x1xi1>
    %cst_16 = arith.constant 1.000000e+00 : f32
    %cst_17 = arith.constant 0.000000e+00 : f32
    %62 = vector.broadcast %cst_16 : f32 to vector<16x1xf32>
    %63 = vector.broadcast %cst_17 : f32 to vector<16x1xf32>
    %64 = arith.select %61, %62, %63 : vector<16x1xi1>, vector<16x1xf32>
    %65 = vector.shape_cast %64 : vector<16x1xf32> to vector<1x16x1xf32>
    %cst_18 = arith.constant dense<0.000000e+00> : vector<1xf32>
    %66 = vector.multi_reduction <add>, %65, %cst_18 [1, 2] : vector<1x16x1xf32> to vector<1xf32>
    %67 = vector.shape_cast %66 : vector<1xf32> to vector<1x1x1xf32>
    %68 = vector.extract %67[0, 0, 0] : f32 from vector<1x1x1xf32>
    %c0_i32_19 = arith.constant 0 : i32
    %69 = arith.cmpi eq, %arg1, %c0_i32_19 : i32
    %70 = arith.extui %69 : i1 to i32
    %c0_i32_20 = arith.constant 0 : i32
    %71 = arith.cmpi ne, %70, %c0_i32_20 : i32
    scf.if %71 {
      %cst_31 = arith.constant 0.000000e+00 : f32
      %96 = vector.broadcast %cst_31 : f32 to vector<1x8x128xf32>
      %c0_32 = arith.constant 0 : index
      %c0_33 = arith.constant 0 : index
      %c0_34 = arith.constant 0 : index
      %97 = vector.load %arg4[%c0_32, %c0_33, %c0_34] : memref<1x8x128xf32, #tpu.memory_space<vmem>>, vector<1x8x128xf32>
      tpu.vector_store %arg4[%c0_32, %c0_33, %c0_34], %96 {strides = array<i32>} : memref<1x8x128xf32, #tpu.memory_space<vmem>>, vector<1x8x128xf32>,
    } else {
    }
    %72 = tpu.iota {dimensions = array<i32: 1>} : vector<1x8x128xi32>
    %73 = tpu.iota {dimensions = array<i32: 2>} : vector<1x8x128xi32>
    %c0_21 = arith.constant 0 : index
    %c0_22 = arith.constant 0 : index
    %c0_23 = arith.constant 0 : index
    %74 = vector.load %arg4[%c0_21, %c0_22, %c0_23] : memref<1x8x128xf32, #tpu.memory_space<vmem>>, vector<1x8x128xf32>
    %c0_i32_24 = arith.constant 0 : i32
    %75 = vector.broadcast %c0_i32_24 : i32 to vector<1x8x128xi32>
    %76 = arith.cmpi eq, %72, %75 : vector<1x8x128xi32>
    %c0_i32_25 = arith.constant 0 : i32
    %77 = vector.broadcast %c0_i32_25 : i32 to vector<1x8x128xi32>
    %78 = arith.cmpi eq, %73, %77 : vector<1x8x128xi32>
    %79 = arith.andi %76, %78 : vector<1x8x128xi1>
    %80 = vector.broadcast %49 : f32 to vector<1x1x1xf32>
    %c0_i32_26 = arith.constant 0 : i32
    %81 = vector.broadcast %c0_i32_26 : i32 to vector<1x8x128xi32>
    %82 = arith.cmpi eq, %72, %81 : vector<1x8x128xi32>
    %c1_i32 = arith.constant 1 : i32
    %83 = vector.broadcast %c1_i32 : i32 to vector<1x8x128xi32>
    %84 = arith.cmpi eq, %73, %83 : vector<1x8x128xi32>
    %85 = arith.andi %82, %84 : vector<1x8x128xi1>
    %86 = vector.broadcast %68 : f32 to vector<1x1x1xf32>
    %cst_27 = arith.constant 0.000000e+00 : f32
    %87 = vector.shape_cast %86 : vector<1x1x1xf32> to vector<1x1x1xf32>
    %88 = vector.broadcast %87 : vector<1x1x1xf32> to vector<1x8x128xf32>
    %89 = vector.broadcast %cst_27 : f32 to vector<1x8x128xf32>
    %90 = arith.select %85, %88, %89 : vector<1x8x128xi1>, vector<1x8x128xf32>
    %91 = vector.shape_cast %80 : vector<1x1x1xf32> to vector<1x1x1xf32>
    %92 = vector.broadcast %91 : vector<1x1x1xf32> to vector<1x8x128xf32>
    %93 = arith.select %79, %92, %90 : vector<1x8x128xi1>, vector<1x8x128xf32>
    %94 = arith.addf %74, %93 : vector<1x8x128xf32>
    %c0_28 = arith.constant 0 : index
    %c0_29 = arith.constant 0 : index
    %c0_30 = arith.constant 0 : index
    %95 = vector.load %arg4[%c0_28, %c0_29, %c0_30] : memref<1x8x128xf32, #tpu.memory_space<vmem>>, vector<1x8x128xf32>
    tpu.vector_store %arg4[%c0_28, %c0_29, %c0_30], %94 {strides = array<i32>} : memref<1x8x128xf32, #tpu.memory_space<vmem>>, vector<1x8x128xf32>,
    return
  }
  func.func @transform_0(%arg0: i32, %arg1: i32) -> (i32, i32) {
    %c1_i32 = arith.constant 1 : i32
    %0 = arith.muli %arg0, %c1_i32 : i32
    %1 = arith.addi %0, %arg1 : i32
    %c0_i32 = arith.constant 0 : i32
    %c0_i32_0 = arith.constant 0 : i32
    return %1, %c0_i32 : i32, i32
  }
  func.func @transform_1(%arg0: i32, %arg1: i32) -> (i32, i32) {
    %c1_i32 = arith.constant 1 : i32
    %0 = arith.muli %arg0, %c1_i32 : i32
    %1 = arith.addi %0, %arg1 : i32
    %c0_i32 = arith.constant 0 : i32
    %c0_i32_0 = arith.constant 0 : i32
    return %1, %c0_i32 : i32, i32
  }
  func.func @transform_2(%arg0: i32, %arg1: i32) -> (i32, i32, i32) {
    %c0_i32 = arith.constant 0 : i32
    %c0_i32_0 = arith.constant 0 : i32
    %c0_i32_1 = arith.constant 0 : i32
    return %arg0, %c0_i32, %c0_i32_0 : i32, i32, i32
  }
}

</mosaic_0001>

<llo_original>
// kernel: tpu_custom_call.1
$region0: #{tpu_custom_call.1}
  #allocation0 [shape = 'u32[]', space=smem, size = 0x4, offset = 0x4, fixed_abs, tag = 'smem constant byte address 0x4 - core index']
  #allocation1 [shape = 'u32[72,128]{1,0:T(1,128)}', space=vmem, size = 0x9000, scoped, tag = 'internal scratch']
  %s0 = inlined_call_operand.vmem [shape: bf16[16,32], index: 0, kind: input, shape index: {}]
  %s1 = inlined_call_operand.vmem [shape: s32[16,1], index: 1, kind: input, shape index: {}]
  %s2 = inlined_call_operand.hbm [shape: f32[1,8,128], index: 2, kind: output, shape index: {}]
  %s3 = sld [smem:[#allocation0]]
  $region22: #{tpu_custom_call.1} parent=0
    _
  %s5 = ssub.s32 1, %s3
  %s6 = scalar_select 0, %s5, %s3
  $region1: #{tpu_custom_call.1} parent=0
    #allocation2 [shape = 'u8[4096]{0}', space=vmem, size = 0x1000, scoped, tag = 'output window, operand 0, single buffered']
    #allocation3 [shape = 's32[1]{0}', space=sflag, size = 0x4, scoped, tag = 'scoped memory for tpu_custom_call.1']
    %7 = vsyncpa [#allocation3], 0
    // Predicated region
    $region2: #{tpu_custom_call.1} parent=1 // pred_check
      _
    $region3: #{tpu_custom_call.1} parent=1 // pred_check_branch
      %9 = sbr.rel (0) target = $region5
    $region4: #{tpu_custom_call.1} parent=1 // pred_region
      %s10 = sadd.s32 0, 0
      %s11 = smul.u32 2, %s10
      %p12 = scmp.lt.s32.totalorder %s11, 1
      %s13 = scalar_select %p12, %s11, 1
      %s14 = smul.addr %s13, 4
      %s15 = scalar_lea.vmem %s0, %s14
      %s16 = sadd.s32 0, 0
      %s17 = smul.u32 2, %s16
    $region5: #{tpu_custom_call.1} parent=1 // pred_fallthru
      _
    // Predicated region
    $region6: #{tpu_custom_call.1} parent=1 // pred_check
      _
    $region7: #{tpu_custom_call.1} parent=1 // pred_check_branch
      %19 = sbr.rel (0) target = $region9
    $region8: #{tpu_custom_call.1} parent=1 // pred_region
      %s20 = sadd.s32 0, 0
      %s21 = smul.u32 2, %s20
      %p22 = scmp.lt.s32.totalorder %s21, 1
      %s23 = scalar_select %p22, %s21, 1
      %s24 = smul.addr %s23, 8
      %s25 = scalar_lea.vmem %s1, %s24
      %s26 = sadd.s32 0, 0
      %s27 = smul.u32 2, %s26
    $region9: #{tpu_custom_call.1} parent=1 // pred_fallthru
      _
    %s28 = sadd.s32 0, 0
    %s29 = smul.u32 2, %s28
    %p30 = scmp.lt.s32.totalorder %s29, 1
    %s31 = scalar_select %p30, %s29, 1
    %s32 = smul.addr %s31, 4
    %s33 = scalar_lea.vmem %s0, %s32
    %s34 = sadd.s32 0, 0
    %s35 = smul.u32 2, %s34
    %p36 = scmp.lt.s32.totalorder %s35, 1
    %s37 = scalar_select %p36, %s35, 1
    %s38 = smul.addr %s37, 8
    %s39 = scalar_lea.vmem %s1, %s38
    %s40 = sadd.s32 0, 0
    %s41 = smul.u32 2, %s40
    %p42 = scmp.lt.s32.totalorder %s41, 1
    %s43 = scalar_select %p42, %s41, 1
    %s44 = smul.addr %s43, 4
    %s45 = scalar_lea.vmem %s0, %s44
    %s46 = sadd.s32 0, 0
    %s47 = smul.u32 2, %s46
    %s48 = sadd.s32 0, 0
    %s49 = smul.u32 2, %s48
    %p50 = scmp.lt.s32.totalorder %s49, 1
    %s51 = scalar_select %p50, %s49, 1
    %s52 = smul.addr %s51, 8
    %s53 = scalar_lea.vmem %s1, %s52
    %s54 = sadd.s32 0, 0
    %s55 = smul.u32 2, %s54
    %v56 = vld [vmem:[%s45] sm:$0xf]
    %v57 = vld [vmem:[%s45 + $0x4] sm:$0xf]
    %v58 = vunpack.c.l.bf16 %v56
    %v59 = vunpack.c.l.bf16 %v57
    %v60 = vld [vmem:[%s53] sm:$0xff]
    %v61 = vld [vmem:[%s53 + $0x8] sm:$0xff]
    %v62 = vlaneseq
    %v63 = vand.u32 %v62, 127
    %64 = vset.pattern.permute.xlu0 0
    %65 = vperm.xlu0 %64, %v60
    %v66 = vpop.permute.xlu0 %65
    %67 = vset.pattern.permute.xlu0 0
    %68 = vperm.xlu0 %67, %v61
    %v69 = vpop.permute.xlu0 %68
    %vm70 = vcmp.eq.s32.totalorder %v63, %v66
    %vm71 = vcmp.eq.s32.totalorder %v63, %v69
    %v72 = vsel %vm70, 1, 0
    %v73 = vsel %vm71, 1, 0
    %v74 = vcvt.s32.f32 %v72
    %v75 = vcvt.s32.f32 %v73
    %v76 = vand.u32 2147483647, %v58
    %v77 = vand.u32 2147483647, %v59
    %v78 = vsub.f32 0.0, %v76
    %v79 = vsub.f32 0.0, %v77
    %v80 = vmul.f32 %v78, 1.442695
    %v81 = vpow.pop %v80
    %v82 = vmul.f32 %v79, 1.442695
    %v83 = vpow.pop %v82
    %v84 = vmax.f32 %v58, 0.0
    %v85 = vmax.f32 %v59, 0.0
    %v86 = vmul.f32 %v58, %v74
    %v87 = vmul.f32 %v59, %v75
    %v88 = vsub.f32 %v84, %v86
    %v89 = vsub.f32 %v85, %v87
    %v90 = vadd.f32 %v81, 1.0
    %v91 = vadd.f32 %v83, 1.0
    %v92 = vlog2.pop %v90
    %v93 = vmul.f32 %v92, 0.6931472
    %v94 = vlog2.pop %v91
    %v95 = vmul.f32 %v94, 0.6931472
    %v96 = vadd.f32 %v88, %v93
    %v97 = vadd.f32 %v89, %v95
    %v98 = vrcp.pop %v90
    %v99 = vrcp.pop %v91
    %vm100 = vcmp.ge.f32.partialorder %v58, 0.0
    %vm101 = vcmp.ge.f32.partialorder %v59, 0.0
    %v102 = vmul.f32 %v81, %v98
    %v103 = vmul.f32 %v83, %v99
    %v104 = vsel %vm100, %v98, %v102
    %v105 = vsel %vm101, %v99, %v103
    %v106 = vmul.f32 %v104, %v74
    %v107 = vmul.f32 %v105, %v75
    %v108 = vsub.f32 1.0, %v104
    %v109 = vsub.f32 1.0, %v105
    %v110 = vsub.f32 1.0, %v74
    %v111 = vsub.f32 1.0, %v75
    %v112 = vmul.f32 %v108, %v110
    %v113 = vmul.f32 %v109, %v111
    %v114 = vadd.f32 %v106, %v112
    %v115 = vadd.f32 %v107, %v113
    %v116 = vmul.f32 %v74, 0.25
    %v117 = vmul.f32 %v75, 0.25
    %v118 = vmul.f32 %v110, 0.75
    %v119 = vmul.f32 %v111, 0.75
    %v120 = vadd.f32 %v116, %v118
    %v121 = vadd.f32 %v117, %v119
    %v122 = vmul.f32 %v120, %v96
    %v123 = vmul.f32 %v121, %v97
    %v124 = vsub.f32 1.0, %v114
    %v125 = vsub.f32 1.0, %v115
    %v126 = vmul.f32 %v124, %v124
    %v127 = vmul.f32 %v125, %v125
    %v128 = vmul.f32 %v122, %v126
    %v129 = vmul.f32 %v123, %v127
    %vm130 = vcmask 261120
    %v131 = vsel %vm130, %v128, 0.0
    %v132 = vsel %vm130, %v129, 0.0
    %v133 = vadd.f32 %v131, %v132
    %134 = vadd.xlane.f32.xlu0 %v133
    %v135 = vpop.xlane.xlu0 %134
    %v136 = vrot.slane %v135, 4
    %v137 = vadd.f32 %v135, %v136
    %v138 = vrot.slane %v137, 2
    %v139 = vadd.f32 %v137, %v138
    %v140 = vrot.slane %v139, 1
    %v141 = vadd.f32 %v139, %v140
    %s142 = vtos %v141
    %v143 = vsel %vm130, %v58, -inf
    %144 = vmax.xlane.f32.xlu0 %v143
    %v145 = vpop.xlane.xlu0 %144
    %v146 = vsel %vm130, %v59, -inf
    %147 = vmax.xlane.f32.xlu0 %v146
    %v148 = vpop.xlane.xlu0 %147
    %vm149 = vcmp.eq.f32.partialorder %v58, %v145
    %vm150 = vcmp.eq.f32.partialorder %v59, %v148
    %v151 = vsel %vm149, %v63, 32
    %v152 = vsel %vm150, %v63, 32
    %v153 = vsel %vm130, %v151, 2147483647
    %v154 = vand.u32 %v153, 65535
    %v155 = vshra.s32 %v153, 16
    %v156 = vcvt.s32.f32 %v154
    %v157 = vcvt.s32.f32 %v155
    %158 = vmin.xlane.f32.xlu0 %v157
    %v159 = vpop.xlane.xlu0 %158
    %vm160 = vcmp.eq.f32.partialorder %v157, %v159
    %v161 = vsel %vm160, %v156, inf
    %162 = vmin.xlane.f32.xlu0 %v161
    %v163 = vpop.xlane.xlu0 %162
    %v164 = vcvt.f32.s32 %v163
    %v165 = vcvt.f32.s32 %v159
    %v166 = vshll.u32 %v165, 16
    %v167 = vadd.s32 %v166, %v164
    %v168 = vsel %vm130, %v152, 2147483647
    %v169 = vand.u32 %v168, 65535
    %v170 = vshra.s32 %v168, 16
    %v171 = vcvt.s32.f32 %v169
    %v172 = vcvt.s32.f32 %v170
    %173 = vmin.xlane.f32.xlu0 %v172
    %v174 = vpop.xlane.xlu0 %173
    %vm175 = vcmp.eq.f32.partialorder %v172, %v174
    %v176 = vsel %vm175, %v171, inf
    %177 = vmin.xlane.f32.xlu0 %v176
    %v178 = vpop.xlane.xlu0 %177
    %v179 = vcvt.f32.s32 %v178
    %v180 = vcvt.f32.s32 %v174
    %v181 = vshll.u32 %v180, 16
    %v182 = vadd.s32 %v181, %v179
    %vm183 = vcmp.eq.s32.totalorder %v167, %v60
    %vm184 = vcmp.eq.s32.totalorder %v182, %v61
    %vm185 = vcmp.ge.s32.totalorder %v60, 0
    %vm186 = vcmp.ge.s32.totalorder %v61, 0
    %vm187 = vmand %vm183, %vm185
    %vm188 = vmand %vm184, %vm186
    %v189 = vsel %vm187, 1.0, 0.0
    %v190 = vsel %vm188, 1.0, 0.0
    %vm191 = vcmask 7168
    %v192 = vsel %vm191, %v189, 0.0
    %v193 = vsel %vm191, %v190, 0.0
    %v194 = vadd.f32 %v192, %v193
    %195 = vadd.xlane.f32.xlu0 %v194
    %v196 = vpop.xlane.xlu0 %195
    %v197 = vrot.slane %v196, 4
    %v198 = vadd.f32 %v196, %v197
    %v199 = vrot.slane %v198, 2
    %v200 = vadd.f32 %v198, %v199
    %v201 = vrot.slane %v200, 1
    %v202 = vadd.f32 %v200, %v201
    %s203 = vtos %v202
    %p204 = scmp.eq.s32.totalorder 0, 0
    // Predicated region
    $region10: #{tpu_custom_call.1} parent=1 // pred_check
      %p205 = pneg %p204
    $region11: #{tpu_custom_call.1} parent=1 // pred_check_branch
      %207 = sbr.rel (%p205) target = $region13
    $region12: #{tpu_custom_call.1} parent=1 // pred_region
      %208 = vst [vmem:[#allocation2] sm:$0xff] 0.0
    $region13: #{tpu_custom_call.1} parent=1 // pred_fallthru
      _
    %v209 = vlaneseq
    %v210 = vshrl.u32 %v209, 7
    %v211 = vld [vmem:[#allocation2] sm:$0xff]
    %vm212 = vcmp.eq.s32.totalorder %v210, 0
    %vm213 = vcmp.eq.s32.totalorder %v63, 0
    %vm214 = vmand %vm212, %vm213
    %vm215 = vcmp.eq.s32.totalorder %v63, 1
    %vm216 = vmand %vm212, %vm215
    %v217 = vstv %s203
    %v218 = vsel %vm216, %v217, 0.0
    %v219 = vstv %s142
    %v220 = vsel %vm214, %v219, %v218
    %v221 = vadd.f32 %v211, %v220
    %222 = vst [vmem:[#allocation2] sm:$0xff] %v221
    // Predicated region
    $region14: #{tpu_custom_call.1} parent=1 // pred_check
      _
    $region15: #{tpu_custom_call.1} parent=1 // pred_check_branch
      %224 = sbr.rel (0) target = $region17
    $region16: #{tpu_custom_call.1} parent=1 // pred_region
      %226 = vsyncadd [#allocation3], 0
      %s228 = sshll.u32 [#allocation2], 4
      %s229 = int_to_ptr.vmem [resolvable:$true] %s228
      %s230 = sshll.u32 %s2, 4
      %s231 = int_to_ptr.hbm [resolvable:$true] %s230
      %233 = dma.vmem_to_hbm [thread:$0]  %s229, 128, %s231, [#allocation3]
    $region17: #{tpu_custom_call.1} parent=1 // pred_fallthru
      _
    // Predicated region
    $region18: #{tpu_custom_call.1} parent=1 // pred_check
      _
    $region19: #{tpu_custom_call.1} parent=1 // pred_check_branch
      %235 = sbr.rel (0) target = $region21
    $region20: #{tpu_custom_call.1} parent=1 // pred_region
      %237 = dma.done [#allocation3], 128
    $region21: #{tpu_custom_call.1} parent=1 // pred_fallthru
      _
    %238 = vsyncpa [#allocation3], 1

</llo_original>
